<compile_context>
chip_gen: v7x
topology: tpu7x:2x2x1
jax: 0.10.0
libtpu: 0.0.40
codegen_flags: <defaults>
</compile_context>

<pallas_src>
import math

import jax
import jax.numpy as jnp
from jax import lax
from jax.experimental import pallas as pl
from jax.experimental.pallas import tpu as pltpu

_INV_SQRT2 = 1.0 / math.sqrt(2.0)


# ----------------------------------------------------------------------------
# Pallas kernel: fused (x @ W_D + b_D) -> exact GELU -> (@ W_U + b_U) -> +x
# ----------------------------------------------------------------------------
def lorand_kernel(x_ref, wd_ref, wu_ref, bd_ref, bu_ref, o_ref):
    x = x_ref[...]                                              # (tm, in_f) native dtype
    wd = wd_ref[...]                                            # (in_f, mid_p)
    # cast for the MXU *inside* the kernel (hidden under DMA in the mem-bound
    # regime); the residual below uses the un-rounded x.
    h = jnp.dot(x.astype(wd.dtype), wd,
                preferred_element_type=jnp.float32)             # (tm, mid_p) f32
    h = h + bd_ref[...]                                         # f32 bias
    # exact GELU (torch.nn.functional.gelu default), f32 on VPU/EUP
    h = 0.5 * h * (1.0 + lax.erf(h * _INV_SQRT2))
    y = jnp.dot(h.astype(wu_ref.dtype), wu_ref[...],
                preferred_element_type=jnp.float32)             # (tm, in_f) f32
    y = y + bu_ref[...]                                         # f32 bias
    # residual add in f32 with the original-precision x, cast once on store
    o_ref[...] = (x.astype(jnp.float32) + y).astype(o_ref.dtype)


# ----------------------------------------------------------------------------
# Tiling helpers
# ----------------------------------------------------------------------------
def _round_up(n, m):
    return ((n + m - 1) // m) * m


def _round_down(n, m):
    return (n // m) * m


def _vmem_budgets():
    """Per-generation VMEM budget: scoped limit + conservative tile budget."""
    cap = 64 * 1024 * 1024                       # safe fallback (v7x physical)
    try:
        cap = int(pltpu.get_tpu_info().vmem_capacity_bytes)
    except Exception:
        pass
    # ~48 MiB scoped limit on v7x (64 MiB physical), ~96 MiB on v5e/v6e (128 MiB)
    limit = min(int(cap * 3 // 4), 96 * 1024 * 1024)
    tile_budget = int(limit * 3 // 4)            # headroom for Mosaic scratch
    return limit, tile_budget


def _choose_tm(M, in_f, mid_p, x_bytes, w_bytes, out_bytes, tile_budget):
    """Largest row tile that fits the VMEM budget, kept deep enough to pipeline."""
    # resident weight/bias blocks, counted double-buffered (default pipelining)
    weight_bytes = 2 * (2 * in_f * mid_p * w_bytes + 4 * (in_f + mid_p))
    # per token row: double-buffered x/out tiles plus the f32 / cast temporaries
    # the kernel materializes (h f32, h cast, y f32, x f32 upcast, x cast)
    per_row = (2 * in_f * x_bytes            # x tile (2 buffers)
               + 2 * in_f * out_bytes        # out tile (2 buffers)
               + mid_p * (4 + w_bytes)       # h f32 + h cast
               + in_f * (4 + 4 + w_bytes))   # y f32 + x f32 upcast + x cast
    avail = tile_budget - weight_bytes
    if avail <= per_row * 8:
        # Weights (nearly) exhaust the budget -> small tile; see TODO above.
        return max(8, min(128, _round_up(M, 8)))
    tm = int(avail // per_row)
    tm = min(tm, 1024)
    # keep the grid >= ~8 steps (>= ~4 per TensorCore on v7x) when M allows it
    if M >= 8 * 256:
        tm = min(tm, max(256, _round_down(M // 8, 256)))
    if tm >= 512:
        tm = _round_down(tm, 256)            # 256x256 MXU alignment (v6e/v7x)
    elif tm >= 128:
        tm = _round_down(tm, 128)
    else:
        tm = max(_round_down(tm, 8), 8)
    tm = min(tm, _round_up(M, 8))            # don't over-tile tiny inputs
    return max(tm, 8)


# ----------------------------------------------------------------------------
# Wrapper: compose the tiny low-rank factors (glue) and launch the kernel
# ----------------------------------------------------------------------------
def lorand_forward(x, params, *, compute_dtype=None, tm=None):
    """y = x + (gelu(x @ W_D + b_D) @ W_U + b_U), feature-last layout."""
    out_dtype = x.dtype
    wdt = jnp.dtype(compute_dtype) if compute_dtype is not None else jnp.dtype(x.dtype)

    # --- compose W_D / W_U from the rank-k factors (tiny matmuls: plain JAX) ---
    num_branch = len(params["DP"])
    in_f = params["DP"][0].shape[0]
    mid_f = params["DQ"][0].shape[1]
    wd = jnp.zeros((in_f, mid_f), jnp.float32)
    wu = jnp.zeros((mid_f, in_f), jnp.float32)
    for b in range(num_branch):
        wd = wd + params["DP"][b] @ params["K"][b] @ params["DQ"][b]   # (in, mid)
        wu = wu + params["UP"][b] @ params["K"][b] @ params["UQ"][b]   # (mid, in)

    # --- pad ONLY the (tiny) weights along mid so the hidden tile is lane-dense;
    #     the activation / in-feature dim is never padded (no extra HBM pass) ---
    mid_p = _round_up(mid_f, 128)
    wd_p = jnp.zeros((in_f, mid_p), jnp.float32).at[:, :mid_f].set(wd).astype(wdt)
    wu_p = jnp.zeros((mid_p, in_f), jnp.float32).at[:mid_f, :].set(wu).astype(wdt)
    bd_p = jnp.zeros((1, mid_p), jnp.float32).at[0, :mid_f].set(
        params["bias_D"].astype(jnp.float32))
    bu_p = params["bias_U"].astype(jnp.float32).reshape(1, in_f)

    # --- flatten tokens (collapsing leading dims: no HBM copy) ---
    orig_shape = x.shape
    xm = x.reshape(-1, in_f)
    M = xm.shape[0]

    x_bytes = jnp.dtype(x.dtype).itemsize
    o_bytes = jnp.dtype(out_dtype).itemsize
    w_bytes = jnp.dtype(wdt).itemsize
    vmem_limit, tile_budget = _vmem_budgets()
    if tm is None:
        tm = _choose_tm(M, in_f, mid_p, x_bytes, w_bytes, o_bytes, tile_budget)
    grid = pl.cdiv(M, tm)          # ragged last block is masked by Pallas

    cost = pl.CostEstimate(
        flops=4 * M * in_f * mid_p,
        transcendentals=M * mid_p,
        bytes_accessed=(M * in_f * (x_bytes + o_bytes)
                        + 2 * in_f * mid_p * w_bytes
                        + 4 * (in_f + mid_p)),
    )

    out = pl.pallas_call(
        lorand_kernel,
        out_shape=jax.ShapeDtypeStruct((M, in_f), out_dtype),
        grid_spec=pltpu.PrefetchScalarGridSpec(
            num_scalar_prefetch=0,
            grid=(grid,),
            in_specs=[
                pl.BlockSpec((tm, in_f), lambda i: (i, 0)),      # x row tile (streamed)
                pl.BlockSpec((in_f, mid_p), lambda i: (0, 0)),   # W_D (VMEM resident)
                pl.BlockSpec((mid_p, in_f), lambda i: (0, 0)),   # W_U (VMEM resident)
                pl.BlockSpec((1, mid_p), lambda i: (0, 0)),      # bias_D (f32)
                pl.BlockSpec((1, in_f), lambda i: (0, 0)),       # bias_U (f32)
            ],
            out_specs=pl.BlockSpec((tm, in_f), lambda i: (i, 0)),
        ),
        compiler_params=pltpu.CompilerParams(
            dimension_semantics=("parallel",),       # megacore-shardable on v7x
            vmem_limit_bytes=int(vmem_limit),
        ),
        cost_estimate=cost,
    )(xm, wd_p, wu_p, bd_p, bu_p)

    return out.reshape(orig_shape)


# ----------------------------------------------------------------------------
# Deterministic parameter init (mirrors kaiming_uniform_(a=sqrt(5)) bounds)
# ----------------------------------------------------------------------------
def kaiming_uniform(key, shape):
    # kaiming_uniform_ with a=sqrt(5): bound = 1/sqrt(fan_in)
    fan_in = shape[1]
    bound = 1.0 / math.sqrt(fan_in)
    return jax.random.uniform(key, shape, jnp.float32, -bound, bound)


def init_lorand_params(key, in_features, mid_features, kernel_dim=2, num_branch=2):
    params = {"DP": [], "DQ": [], "K": [], "UP": [], "UQ": []}
    keys = jax.random.split(key, num_branch * 5 + 2)
    k_idx = 0
    for _ in range(num_branch):
        params["DP"].append(kaiming_uniform(keys[k_idx], (in_features, kernel_dim))); k_idx += 1
        params["DQ"].append(kaiming_uniform(keys[k_idx], (kernel_dim, mid_features))); k_idx += 1
        params["K"].append(kaiming_uniform(keys[k_idx], (kernel_dim, kernel_dim))); k_idx += 1
        params["UP"].append(kaiming_uniform(keys[k_idx], (mid_features, kernel_dim))); k_idx += 1
        params["UQ"].append(kaiming_uniform(keys[k_idx], (kernel_dim, in_features))); k_idx += 1
    # bias bounds from reset_parameters: fan_in of D_weight (mid,in) = in; of U_weight = mid
    bound_D = 1.0 / math.sqrt(in_features)
    bound_U = 1.0 / math.sqrt(mid_features)
    params["bias_D"] = jax.random.uniform(keys[k_idx], (mid_features,), jnp.float32,
                                          -bound_D, bound_D); k_idx += 1
    params["bias_U"] = jax.random.uniform(keys[k_idx], (in_features,), jnp.float32,
                                          -bound_U, bound_U)
    return params


def lorand_reference(x, params, compute_dtype=None):
    """Plain-JAX reference of the PyTorch forward (same operand rounding as kernel)."""
    wdt = jnp.dtype(compute_dtype) if compute_dtype is not None else jnp.dtype(x.dtype)
    wd = 0.0
    wu = 0.0
    for b in range(len(params["DP"])):
        wd = wd + params["DP"][b] @ params["K"][b] @ params["DQ"][b]
        wu = wu + params["UP"][b] @ params["K"][b] @ params["UQ"][b]
    h = jnp.dot(x.astype(wdt), wd.astype(wdt),
                preferred_element_type=jnp.float32) + params["bias_D"]
    h = 0.5 * h * (1.0 + lax.erf(h * _INV_SQRT2))
    y = jnp.dot(h.astype(wdt), wu.astype(wdt),
                preferred_element_type=jnp.float32) + params["bias_U"]
    return (x.astype(jnp.float32) + y).astype(x.dtype)


if __name__ == "__main__":
    in_features = 32
    mid_features = 16
    batch, seq = 2, 8

    key = jax.random.PRNGKey(0)
    k_params, k_x = jax.random.split(key)
    params = init_lorand_params(k_params, in_features, mid_features,
                                kernel_dim=2, num_branch=2)

    x = jax.random.normal(k_x, (batch, seq, in_features), dtype=jnp.float32)

    # f32 path: matches the PyTorch module's default numerics.
    out = jax.block_until_ready(lorand_forward(x, params))
    ref = lorand_reference(x, params)
    assert out.shape == x.shape
    assert jnp.allclose(out, ref, atol=1e-5, rtol=1e-5), float(jnp.abs(out - ref).max())

    # bf16 MXU-operand path: bf16 dot operands (cast in-kernel), f32 accumulation,
    # f32 bias / GELU / residual with the un-rounded x.
    out_bf = jax.block_until_ready(
        lorand_forward(x, params, compute_dtype=jnp.bfloat16))
    ref_bf = lorand_reference(x, params, compute_dtype=jnp.bfloat16)
    assert out_bf.shape == x.shape
    assert jnp.allclose(out_bf, ref_bf, atol=2e-2, rtol=2e-2), \
        float(jnp.abs(out_bf - ref_bf).max())

    print("KERNEL_OK")
</pallas_src>

<mosaic_0001>
module attributes {stable_mosaic.version = 11 : i64} {
  func.func @lorand_kernel(%arg0: i32, %arg1: memref<16x32xf32, #tpu.memory_space<vmem>>, %arg2: memref<32x128xf32, #tpu.memory_space<vmem>>, %arg3: memref<128x32xf32, #tpu.memory_space<vmem>>, %arg4: memref<1x128xf32, #tpu.memory_space<vmem>>, %arg5: memref<1x32xf32, #tpu.memory_space<vmem>>, %arg6: memref<16x32xf32, #tpu.memory_space<vmem>>) attributes {dimension_semantics = [#tpu.dimension_semantics<parallel>], iteration_bounds = array<i64: 1>, scalar_prefetch = 0 : i64, scratch_operands = 0 : i64, tpu.core_type = #tpu.core_type<tc>, window_params = [{transform_indices = @transform_0, window_bounds = array<i64: 16, 32>}, {pipeline_mode = #tpu.pipeline_mode<synchronous>, transform_indices = @transform_1, window_bounds = array<i64: 32, 128>}, {pipeline_mode = #tpu.pipeline_mode<synchronous>, transform_indices = @transform_2, window_bounds = array<i64: 128, 32>}, {pipeline_mode = #tpu.pipeline_mode<synchronous>, transform_indices = @transform_3, window_bounds = array<i64: 1, 128>}, {pipeline_mode = #tpu.pipeline_mode<synchronous>, transform_indices = @transform_4, window_bounds = array<i64: 1, 32>}, {transform_indices = @transform_5, window_bounds = array<i64: 16, 32>}]} {
    %c0 = arith.constant 0 : index
    %c0_0 = arith.constant 0 : index
    %0 = vector.load %arg1[%c0, %c0_0] : memref<16x32xf32, #tpu.memory_space<vmem>>, vector<16x32xf32>
    %c0_1 = arith.constant 0 : index
    %c0_2 = arith.constant 0 : index
    %1 = vector.load %arg2[%c0_1, %c0_2] : memref<32x128xf32, #tpu.memory_space<vmem>>, vector<32x128xf32>
    %cst = arith.constant dense<0.000000e+00> : vector<16x128xf32>
    %2 = tpu.matmul %0, %1, %cst {dimension_numbers = #tpu.dot_dimension_numbers<[1], [0], [0], [1], [0, 0, 1, 1], [], []>} : vector<16x32xf32>, vector<32x128xf32>, vector<16x128xf32> -> vector<16x128xf32>
    %c0_3 = arith.constant 0 : index
    %c0_4 = arith.constant 0 : index
    %3 = vector.load %arg4[%c0_3, %c0_4] : memref<1x128xf32, #tpu.memory_space<vmem>>, vector<1x128xf32>
    %4 = vector.broadcast %3 : vector<1x128xf32> to vector<16x128xf32>
    %5 = arith.addf %2, %4 : vector<16x128xf32>
    %cst_5 = arith.constant 5.000000e-01 : f32
    %6 = vector.broadcast %cst_5 : f32 to vector<16x128xf32>
    %7 = arith.mulf %6, %5 : vector<16x128xf32>
    %cst_6 = arith.constant 0.707106769 : f32
    %8 = vector.broadcast %cst_6 : f32 to vector<16x128xf32>
    %9 = arith.mulf %5, %8 : vector<16x128xf32>
    %10 = math.erf %9 : vector<16x128xf32>
    %cst_7 = arith.constant 1.000000e+00 : f32
    %11 = vector.broadcast %cst_7 : f32 to vector<16x128xf32>
    %12 = arith.addf %11, %10 : vector<16x128xf32>
    %13 = arith.mulf %7, %12 : vector<16x128xf32>
    %c0_8 = arith.constant 0 : index
    %c0_9 = arith.constant 0 : index
    %14 = vector.load %arg3[%c0_8, %c0_9] : memref<128x32xf32, #tpu.memory_space<vmem>>, vector<128x32xf32>
    %cst_10 = arith.constant dense<0.000000e+00> : vector<16x32xf32>
    %15 = tpu.matmul %13, %14, %cst_10 {dimension_numbers = #tpu.dot_dimension_numbers<[1], [0], [0], [1], [0, 0, 1, 1], [], []>} : vector<16x128xf32>, vector<128x32xf32>, vector<16x32xf32> -> vector<16x32xf32>
    %c0_11 = arith.constant 0 : index
    %c0_12 = arith.constant 0 : index
    %16 = vector.load %arg5[%c0_11, %c0_12] : memref<1x32xf32, #tpu.memory_space<vmem>>, vector<1x32xf32>
    %17 = vector.broadcast %16 : vector<1x32xf32> to vector<16x32xf32>
    %18 = arith.addf %15, %17 : vector<16x32xf32>
    %19 = arith.addf %0, %18 : vector<16x32xf32>
    %c0_13 = arith.constant 0 : index
    %c0_14 = arith.constant 0 : index
    %20 = vector.load %arg6[%c0_13, %c0_14] : memref<16x32xf32, #tpu.memory_space<vmem>>, vector<16x32xf32>
    tpu.vector_store %arg6[%c0_13, %c0_14], %19 {strides = array<i32>} : memref<16x32xf32, #tpu.memory_space<vmem>>, vector<16x32xf32>,
    return
  }
  func.func @transform_0(%arg0: i32) -> (i32, i32) {
    %c0_i32 = arith.constant 0 : i32
    %c0_i32_0 = arith.constant 0 : i32
    return %arg0, %c0_i32 : i32, i32
  }
  func.func @transform_1(%arg0: i32) -> (i32, i32) {
    %c0_i32 = arith.constant 0 : i32
    %c0_i32_0 = arith.constant 0 : i32
    %c0_i32_1 = arith.constant 0 : i32
    return %c0_i32, %c0_i32_0 : i32, i32
  }
  func.func @transform_2(%arg0: i32) -> (i32, i32) {
    %c0_i32 = arith.constant 0 : i32
    %c0_i32_0 = arith.constant 0 : i32
    %c0_i32_1 = arith.constant 0 : i32
    return %c0_i32, %c0_i32_0 : i32, i32
  }
  func.func @transform_3(%arg0: i32) -> (i32, i32) {
    %c0_i32 = arith.constant 0 : i32
    %c0_i32_0 = arith.constant 0 : i32
    %c0_i32_1 = arith.constant 0 : i32
    return %c0_i32, %c0_i32_0 : i32, i32
  }
  func.func @transform_4(%arg0: i32) -> (i32, i32) {
    %c0_i32 = arith.constant 0 : i32
    %c0_i32_0 = arith.constant 0 : i32
    %c0_i32_1 = arith.constant 0 : i32
    return %c0_i32, %c0_i32_0 : i32, i32
  }
  func.func @transform_5(%arg0: i32) -> (i32, i32) {
    %c0_i32 = arith.constant 0 : i32
    %c0_i32_0 = arith.constant 0 : i32
    return %arg0, %c0_i32 : i32, i32
  }
}

</mosaic_0001>

<llo_original>
// kernel: tpu_custom_call.1
$region0: #{tpu_custom_call.1}
  #allocation0 [shape = 'u32[]', space=smem, size = 0x4, offset = 0x4, fixed_abs, tag = 'smem constant byte address 0x4 - core index']
  #allocation1 [shape = 'u32[144,128]{1,0:T(1,128)}', space=vmem, size = 0x12000, scoped, tag = 'internal scratch']
  %s0 = inlined_call_operand.vmem [shape: f32[16,32], index: 0, kind: input, shape index: {}]
  %s1 = inlined_call_operand.vmem [shape: f32[32,128], index: 1, kind: input, shape index: {}]
  %s2 = inlined_call_operand.vmem [shape: f32[128,32], index: 2, kind: input, shape index: {}]
  %s3 = inlined_call_operand.vmem [shape: f32[1,128], index: 3, kind: input, shape index: {}]
  %s4 = inlined_call_operand.vmem [shape: f32[1,32], index: 4, kind: input, shape index: {}]
  %s5 = inlined_call_operand.hbm [shape: f32[16,32], index: 5, kind: output, shape index: {}]
  %s6 = sld [smem:[#allocation0]]
  $region30: #{tpu_custom_call.1} parent=0
    _
  %s8 = ssub.s32 1, %s6
  %s9 = scalar_select 0, %s8, %s6
  $region1: #{tpu_custom_call.1} parent=0
    #allocation2 [shape = 'u8[8192]{0}', space=vmem, size = 0x2000, scoped, tag = 'output window, operand 0, single buffered']
    #allocation3 [shape = 's32[1]{0}', space=sflag, size = 0x4, scoped, tag = 'scoped memory for tpu_custom_call.1']
    %10 = vsyncpa [#allocation3], 0
    // Predicated region
    $region2: #{tpu_custom_call.1} parent=1 // pred_check
      _
    $region3: #{tpu_custom_call.1} parent=1 // pred_check_branch
      %12 = sbr.rel (0) target = $region5
    $region4: #{tpu_custom_call.1} parent=1 // pred_region
      _
    $region5: #{tpu_custom_call.1} parent=1 // pred_fallthru
      _
    // Predicated region
    $region6: #{tpu_custom_call.1} parent=1 // pred_check
      _
    $region7: #{tpu_custom_call.1} parent=1 // pred_check_branch
      %14 = sbr.rel (0) target = $region9
    $region8: #{tpu_custom_call.1} parent=1 // pred_region
      _
    $region9: #{tpu_custom_call.1} parent=1 // pred_fallthru
      _
    // Predicated region
    $region10: #{tpu_custom_call.1} parent=1 // pred_check
      _
    $region11: #{tpu_custom_call.1} parent=1 // pred_check_branch
      %16 = sbr.rel (0) target = $region13
    $region12: #{tpu_custom_call.1} parent=1 // pred_region
      _
    $region13: #{tpu_custom_call.1} parent=1 // pred_fallthru
      _
    // Predicated region
    $region14: #{tpu_custom_call.1} parent=1 // pred_check
      _
    $region15: #{tpu_custom_call.1} parent=1 // pred_check_branch
      %18 = sbr.rel (0) target = $region17
    $region16: #{tpu_custom_call.1} parent=1 // pred_region
      _
    $region17: #{tpu_custom_call.1} parent=1 // pred_fallthru
      _
    // Predicated region
    $region18: #{tpu_custom_call.1} parent=1 // pred_check
      _
    $region19: #{tpu_custom_call.1} parent=1 // pred_check_branch
      %20 = sbr.rel (0) target = $region21
    $region20: #{tpu_custom_call.1} parent=1 // pred_region
      _
    $region21: #{tpu_custom_call.1} parent=1 // pred_fallthru
      _
    %v21 = vld [vmem:[%s0] sm:$0xff]
    %v22 = vld [vmem:[%s0 + $0x8] sm:$0xff]
    %v23 = vld [vmem:[%s1] sm:$0xff]
    %v24 = vld [vmem:[%s1 + $0x8] sm:$0xff]
    %v25 = vld [vmem:[%s1 + $0x10] sm:$0xff]
    %v26 = vld [vmem:[%s1 + $0x18] sm:$0xff]
    %v27 = vld [vmem:[%s3] sm:$0x1]
    %v29 = vlaneseq
    %v30 = vshrl.u32 %v29, 7
    %v31 = vsub.s32 0, %v30
    %v32 = vrot.slane %v27, %v31
    %vm34 = vcmask 261120
    %v36 = vsel %vm34, %v21, 0
    %v39 = vsel %vm34, %v22, 0
    %41 = vmatprep.subr.mxu0 0.0
    %42 = vmatpush1.msra.mxu0 %v23
    %43 = vmatprep.subr.mxu0 0.0
    %44 = vmatpush1.msra.mxu0 %v24
    %45 = vmatprep.subr.mxu0 0.0
    %46 = vmatpush1.msra.mxu0 %v25
    %47 = vmatprep.subr.mxu0 0.0
    %48 = vmatpush1.msra.mxu0 %v26
    %49 = vmatprep.subr.mxu0 0.0
    %50 = vmatpush1.msra.mxu0 0.0
    %51 = vmatprep.subr.mxu0 0.0
    %52 = vmatpush1.msra.mxu0 0.0
    %53 = vmatprep.subr.mxu0 0.0
    %54 = vmatpush1.msra.mxu0 0.0
    %55 = vmatprep.subr.mxu0 0.0
    %56 = vmatpush1.msra.mxu0 0.0
    %57 = vmatprep.subr.mxu0 0.0
    %58 = vmatpush1.msra.mxu0 0.0
    %59 = vmatprep.subr.mxu0 0.0
    %60 = vmatpush1.msra.mxu0 0.0
    %61 = vmatprep.subr.mxu0 0.0
    %62 = vmatpush1.msra.mxu0 0.0
    %63 = vmatprep.subr.mxu0 0.0
    %64 = vmatpush1.msra.mxu0 0.0
    %65 = vmatprep.subr.mxu0 0.0
    %66 = vmatpush1.msra.mxu0 0.0
    %67 = vmatprep.subr.mxu0 0.0
    %68 = vmatpush1.msra.mxu0 0.0
    %69 = vmatprep.subr.mxu0 0.0
    %70 = vmatpush1.msra.mxu0 0.0
    %71 = vmatprep.subr.mxu0 0.0
    %72 = vmatpush1.msra.mxu0 0.0
    %73 = vmatprep.subr.mxu0 0.0
    %74 = vmatpush1.msra.mxu0 0.0
    %75 = vmatprep.subr.mxu0 0.0
    %76 = vmatpush1.msra.mxu0 0.0
    %77 = vmatprep.subr.mxu0 0.0
    %78 = vmatpush1.msra.mxu0 0.0
    %79 = vmatprep.subr.mxu0 0.0
    %80 = vmatpush1.msra.mxu0 0.0
    %81 = vmatprep.subr.mxu0 0.0
    %82 = vmatpush1.msra.mxu0 0.0
    %83 = vmatprep.subr.mxu0 0.0
    %84 = vmatpush1.msra.mxu0 0.0
    %85 = vmatprep.subr.mxu0 0.0
    %86 = vmatpush1.msra.mxu0 0.0
    %87 = vmatprep.subr.mxu0 0.0
    %88 = vmatpush1.msra.mxu0 0.0
    %89 = vmatprep.subr.mxu0 0.0
    %90 = vmatpush1.msra.mxu0 0.0
    %91 = vmatprep.subr.mxu0 0.0
    %92 = vmatpush1.msra.mxu0 0.0
    %93 = vmatprep.subr.mxu0 0.0
    %94 = vmatpush1.msra.mxu0 0.0
    %95 = vmatprep.subr.mxu0 0.0
    %96 = vmatpush1.msra.mxu0 0.0
    %97 = vmatprep.subr.mxu0 0.0
    %98 = vmatpush1.msra.mxu0 0.0
    %99 = vmatprep.subr.mxu0 0.0
    %100 = vmatpush1.msra.mxu0 0.0
    %101 = vmatprep.subr.mxu0 0.0
    %102 = vmatpush1.msra.mxu0 0.0
    %103 = vmatprep.subr.mxu0 0.0
    %104 = vmatpush1.msra.mxu0 0.0
    %105 = vmatprep.mubr.f32.mxu0 0.0
    %106 = vmatmul.mubr.f32.gmra.mrb[0].mxu0 %v36
    %v107 = vpop.f32.mrb[0].mxu0
    %v108 = vadd.f32 %v32, %v107
    %v109 = vpop.f32.mrb[0].mxu0
    %110 = vmatprep.mubr.f32.mxu0 0.0
    %111 = vmatmul.mubr.f32.gmra.mrb[0].mxu0 %v39
    %v112 = vpop.f32.mrb[0].mxu0
    %v113 = vadd.f32 %v32, %v112
    %v114 = vpop.f32.mrb[0].mxu0
    %115 = vdwg.mxu0
    %v116 = vmul.f32 %v108, 0.5
    %v117 = vmul.f32 %v113, 0.5
    %v118 = vmul.f32 %v108, 0.70710677
    %v119 = vmul.f32 %v113, 0.70710677
    %v120 = verf.f32.pop %v118
    %v121 = verf.f32.pop %v119
    %v122 = vadd.f32 %v120, 1.0
    %v123 = vadd.f32 %v121, 1.0
    %v124 = vmul.f32 %v116, %v122
    %v125 = vmul.f32 %v117, %v123
    %v126 = vld [vmem:[%s2] sm:$0xff]
    %v127 = vld [vmem:[%s2 + $0x8] sm:$0xff]
    %v128 = vld [vmem:[%s2 + $0x10] sm:$0xff]
    %v129 = vld [vmem:[%s2 + $0x18] sm:$0xff]
    %v130 = vld [vmem:[%s2 + $0x20] sm:$0xff]
    %v131 = vld [vmem:[%s2 + $0x28] sm:$0xff]
    %v132 = vld [vmem:[%s2 + $0x30] sm:$0xff]
    %v133 = vld [vmem:[%s2 + $0x38] sm:$0xff]
    %v134 = vld [vmem:[%s2 + $0x40] sm:$0xff]
    %v135 = vld [vmem:[%s2 + $0x48] sm:$0xff]
    %v136 = vld [vmem:[%s2 + $0x50] sm:$0xff]
    %v137 = vld [vmem:[%s2 + $0x58] sm:$0xff]
    %v138 = vld [vmem:[%s2 + $0x60] sm:$0xff]
    %v139 = vld [vmem:[%s2 + $0x68] sm:$0xff]
    %v140 = vld [vmem:[%s2 + $0x70] sm:$0xff]
    %v141 = vld [vmem:[%s2 + $0x78] sm:$0xff]
    %v142 = vld [vmem:[%s4] sm:$0x1]
    %v144 = vlaneseq
    %v145 = vshrl.u32 %v144, 7
    %v146 = vsub.s32 0, %v145
    %v147 = vrot.slane %v142, %v146
    %149 = vmatprep.subr.mxu0 0.0
    %150 = vmatpush1.msra.mxu0 %v126
    %151 = vmatprep.subr.mxu0 0.0
    %152 = vmatpush1.msra.mxu0 %v127
    %153 = vmatprep.subr.mxu0 0.0
    %154 = vmatpush1.msra.mxu0 %v128
    %155 = vmatprep.subr.mxu0 0.0
    %156 = vmatpush1.msra.mxu0 %v129
    %157 = vmatprep.subr.mxu0 0.0
    %158 = vmatpush1.msra.mxu0 %v130
    %159 = vmatprep.subr.mxu0 0.0
    %160 = vmatpush1.msra.mxu0 %v131
    %161 = vmatprep.subr.mxu0 0.0
    %162 = vmatpush1.msra.mxu0 %v132
    %163 = vmatprep.subr.mxu0 0.0
    %164 = vmatpush1.msra.mxu0 %v133
    %165 = vmatprep.subr.mxu0 0.0
    %166 = vmatpush1.msra.mxu0 %v134
    %167 = vmatprep.subr.mxu0 0.0
    %168 = vmatpush1.msra.mxu0 %v135
    %169 = vmatprep.subr.mxu0 0.0
    %170 = vmatpush1.msra.mxu0 %v136
    %171 = vmatprep.subr.mxu0 0.0
    %172 = vmatpush1.msra.mxu0 %v137
    %173 = vmatprep.subr.mxu0 0.0
    %174 = vmatpush1.msra.mxu0 %v138
    %175 = vmatprep.subr.mxu0 0.0
    %176 = vmatpush1.msra.mxu0 %v139
    %177 = vmatprep.subr.mxu0 0.0
    %178 = vmatpush1.msra.mxu0 %v140
    %179 = vmatprep.subr.mxu0 0.0
    %180 = vmatpush1.msra.mxu0 %v141
    %181 = vmatprep.subr.mxu0 0.0
    %182 = vmatpush1.msra.mxu0 0.0
    %183 = vmatprep.subr.mxu0 0.0
    %184 = vmatpush1.msra.mxu0 0.0
    %185 = vmatprep.subr.mxu0 0.0
    %186 = vmatpush1.msra.mxu0 0.0
    %187 = vmatprep.subr.mxu0 0.0
    %188 = vmatpush1.msra.mxu0 0.0
    %189 = vmatprep.subr.mxu0 0.0
    %190 = vmatpush1.msra.mxu0 0.0
    %191 = vmatprep.subr.mxu0 0.0
    %192 = vmatpush1.msra.mxu0 0.0
    %193 = vmatprep.subr.mxu0 0.0
    %194 = vmatpush1.msra.mxu0 0.0
    %195 = vmatprep.subr.mxu0 0.0
    %196 = vmatpush1.msra.mxu0 0.0
    %197 = vmatprep.subr.mxu0 0.0
    %198 = vmatpush1.msra.mxu0 0.0
    %199 = vmatprep.subr.mxu0 0.0
    %200 = vmatpush1.msra.mxu0 0.0
    %201 = vmatprep.subr.mxu0 0.0
    %202 = vmatpush1.msra.mxu0 0.0
    %203 = vmatprep.subr.mxu0 0.0
    %204 = vmatpush1.msra.mxu0 0.0
    %205 = vmatprep.subr.mxu0 0.0
    %206 = vmatpush1.msra.mxu0 0.0
    %207 = vmatprep.subr.mxu0 0.0
    %208 = vmatpush1.msra.mxu0 0.0
    %209 = vmatprep.subr.mxu0 0.0
    %210 = vmatpush1.msra.mxu0 0.0
    %211 = vmatprep.subr.mxu0 0.0
    %212 = vmatpush1.msra.mxu0 0.0
    %213 = vmatprep.mubr.f32.mxu0 0.0
    %214 = vmatmul.mubr.f32.gmra.mrb[0].mxu0 %v124
    %v215 = vpop.f32.mrb[0].mxu0
    %v216 = vadd.f32 %v147, %v215
    %v217 = vpop.f32.mrb[0].mxu0
    %218 = vmatprep.mubr.f32.mxu0 0.0
    %219 = vmatmul.mubr.f32.gmra.mrb[0].mxu0 %v125
    %v220 = vpop.f32.mrb[0].mxu0
    %v221 = vadd.f32 %v147, %v220
    %v222 = vpop.f32.mrb[0].mxu0
    %223 = vdwg.mxu0
    %v224 = vadd.f32 %v21, %v216
    %v225 = vadd.f32 %v22, %v221
    %226 = vst.msk [vmem:[#allocation2] sm:$0xff] %vm34, %v224
    %227 = vst.msk [vmem:[#allocation2 + $0x8] sm:$0xff] %vm34, %v225
    // Predicated region
    $region22: #{tpu_custom_call.1} parent=1 // pred_check
      _
    $region23: #{tpu_custom_call.1} parent=1 // pred_check_branch
      %229 = sbr.rel (0) target = $region25
    $region24: #{tpu_custom_call.1} parent=1 // pred_region
      %s231 = ssub.s32 256, 256
      %232 = vsyncadd [#allocation3], %s231
      %s233 = sshll.u32 [#allocation2], 4
      %s234 = int_to_ptr.vmem [resolvable:$true] %s233
      %239 = dma.vmem_to_hbm [thread:$0]  %s234, 256, %s5, [#allocation3], 128, 128, 8
    $region25: #{tpu_custom_call.1} parent=1 // pred_fallthru
      _
    // Predicated region
    $region26: #{tpu_custom_call.1} parent=1 // pred_check
      _
    $region27: #{tpu_custom_call.1} parent=1 // pred_check_branch
      %241 = sbr.rel (0) target = $region29
    $region28: #{tpu_custom_call.1} parent=1 // pred_region
      %242 = dma.done [#allocation3], 256
    $region29: #{tpu_custom_call.1} parent=1 // pred_fallthru
      _
    %243 = vsyncpa [#allocation3], 1

</llo_original>
